<compile_context>
chip_gen: v6e
topology: v6e:2x2x1
jax: 0.10.0
libtpu: 0.0.40
codegen_flags: <defaults>
</compile_context>

<pallas_src>
import functools

import numpy as np
import jax
import jax.numpy as jnp
from jax.experimental import pallas as pl
from jax.experimental.pallas import tpu as pltpu


def _round_up(x, m):
    return (x + m - 1) // m * m


# ---------------------------------------------------------------------------
# Pallas kernel: one fused MXU GEMM (im2col conv) + bias + BN-affine + act
# ---------------------------------------------------------------------------
def _gemm_epilogue_kernel(p_ref, w_ref, b_ref, s_ref, t_ref, o_ref, *,
                          order, act):
    """p_ref: (1, TILE_L, K*K*Cin)  bf16 im2col patch rows
       w_ref: (K*K*Cin, Cout)       bf16 reshaped conv weight
       b_ref / s_ref / t_ref: (1, Cout) f32 bias / BN scale / BN shift
       o_ref: (1, TILE_L, Cout)."""
    acc = jnp.dot(p_ref[0], w_ref[...],
                  preferred_element_type=jnp.float32)          # MXU, f32 acc
    bias = b_ref[...]        # (1, Cout) f32, broadcast over rows
    scale = s_ref[...]
    shift = t_ref[...]
    acc = acc + bias

    def _activation(v):
        if act == "relu":
            return jnp.maximum(v, 0.0)
        if act == "sigmoid":
            return jax.nn.sigmoid(v)                           # EUP path
        return v

    if order == "bn_act":            # Conv -> BN -> activation
        acc = _activation(acc * scale + shift)
    else:                            # "act_bn": Conv -> activation -> BN
        acc = _activation(acc) * scale + shift

    o_ref[0] = acc.astype(o_ref.dtype)


def conv_bn_act(x, params, *, order, act, out_dtype=jnp.bfloat16):
    """x: (B, H, W, Cin) NHWC.  Returns (B, H, W, Cout)."""
    w, b = params["w"], params["b"]
    scale, shift = params["scale"], params["shift"]
    K = params["k"]
    B, H, W, Cin = x.shape
    Cout = w.shape[-1]
    p = K // 2

    # --- im2col staged in the wrapper (reviewer-sanctioned): one GEMM with
    # contraction depth K*K*Cin instead of K*K shallow matmuls. -------------
    xp = jnp.pad(x, ((0, 0), (p, p), (p, p), (0, 0)))
    taps = [xp[:, ky:ky + H, kx:kx + W, :]
            for ky in range(K) for kx in range(K)]
    patch = jnp.concatenate(taps, axis=-1)                 # (B, H, W, K*K*Cin)
    patch = patch.reshape(B, H * W, K * K * Cin).astype(jnp.bfloat16)

    L = H * W                                              # only valid pixels
    TILE_L = min(256, _round_up(L, 8))                     # sublane aligned
    nt = pl.cdiv(L, TILE_L)
    L_pad = nt * TILE_L
    if L_pad != L:
        patch = jnp.pad(patch, ((0, 0), (0, L_pad - L), (0, 0)))

    w2 = w.reshape(K * K * Cin, Cout).astype(jnp.bfloat16)
    b2 = b.reshape(1, Cout).astype(jnp.float32)
    s2 = scale.reshape(1, Cout).astype(jnp.float32)
    t2 = shift.reshape(1, Cout).astype(jnp.float32)

    kernel = functools.partial(_gemm_epilogue_kernel, order=order, act=act)

    out_flat = pl.pallas_call(
        kernel,
        out_shape=jax.ShapeDtypeStruct((B, L_pad, Cout), out_dtype),
        grid=(B, nt),
        in_specs=[
            pl.BlockSpec((1, TILE_L, K * K * Cin), lambda bb, tt: (bb, tt, 0)),
            pl.BlockSpec((K * K * Cin, Cout), lambda bb, tt: (0, 0)),
            pl.BlockSpec((1, Cout), lambda bb, tt: (0, 0)),
            pl.BlockSpec((1, Cout), lambda bb, tt: (0, 0)),
            pl.BlockSpec((1, Cout), lambda bb, tt: (0, 0)),
        ],
        out_specs=pl.BlockSpec((1, TILE_L, Cout), lambda bb, tt: (bb, tt, 0)),
        compiler_params=pltpu.CompilerParams(
            dimension_semantics=("parallel", "parallel")),
    )(patch, w2, b2, s2, t2)

    return out_flat[:, :L, :].reshape(B, H, W, Cout)


# ---------------------------------------------------------------------------
# Cheap layout glue (kept in plain JAX)
# ---------------------------------------------------------------------------
def maxpool2(x):
    B, H, W, C = x.shape
    return x.reshape(B, H // 2, 2, W // 2, 2, C).max(axis=(2, 4))


def upsample2(x):  # nn.Upsample(scale_factor=2), mode='nearest'
    return jnp.repeat(jnp.repeat(x, 2, axis=1), 2, axis=2)


# ---------------------------------------------------------------------------
# Parameters (deterministic init; BN folded to affine using eval-mode stats)
# ---------------------------------------------------------------------------
def init_params(key, N=1):
    def conv(k_, ksz, cin, cout):
        kw, kb, kg, kbt = jax.random.split(k_, 4)
        w = jax.random.normal(kw, (ksz, ksz, cin, cout), jnp.float32) \
            / np.sqrt(cin * ksz * ksz)
        b = 0.01 * jax.random.normal(kb, (cout,), jnp.float32)
        gamma = 1.0 + 0.1 * jax.random.normal(kg, (cout,), jnp.float32)
        beta = 0.05 * jax.random.normal(kbt, (cout,), jnp.float32)
        eps = 1e-5
        # BatchNorm2d eval: (x - running_mean)/sqrt(running_var+eps)*g + b
        # with default running_mean=0, running_var=1.
        scale = gamma / jnp.sqrt(1.0 + eps)
        shift = beta
        return {"w": w, "b": b, "scale": scale, "shift": shift, "k": ksz}

    specs = {
        # input_layer
        "in0": (3, 3, 8 * N),        "in1": (3, 8 * N, 8 * N),
        # Encoder
        "e00": (3, 8 * N, 16 * N),   "e01": (3, 16 * N, 16 * N),
        "e10": (3, 16 * N, 32 * N),  "e11": (3, 32 * N, 32 * N),
        "e20": (3, 32 * N, 64 * N),  "e21": (3, 64 * N, 64 * N),
        # lent_layer
        "l0": (3, 64 * N, 64 * N),   "l1": (3, 64 * N, 64 * N),
        # Decoder (inputs are 2 * Decoder_input[idx])
        "d00": (3, 128 * N, 32 * N), "d01": (3, 32 * N, 32 * N),
        "d10": (3, 64 * N, 16 * N),  "d11": (3, 16 * N, 16 * N),
        "d20": (3, 32 * N, 8 * N),   "d21": (3, 8 * N, 8 * N),
        # output_layer
        "o0": (3, 16 * N, 3), "o1": (3, 3, 3),
        "o2": (7, 3, 3),      "o3": (7, 3, 1),
    }
    P = {}
    keys = jax.random.split(key, len(specs))
    for k_, (name, (ksz, cin, cout)) in zip(keys, specs.items()):
        P[name] = conv(k_, ksz, cin, cout)
    return P


# ---------------------------------------------------------------------------
# Forward pass (mirrors U_net_RGB.forward, eval mode)
# ---------------------------------------------------------------------------
def double_conv(x, p1, p2, order):
    x = conv_bn_act(x, p1, order=order, act="relu")
    x = conv_bn_act(x, p2, order=order, act="relu")
    return x


def unet_rgb_forward(x_nhwc, P):
    inp = double_conv(x_nhwc, P["in0"], P["in1"], "bn_act")         # Conv,BN,ReLU
    EN0 = double_conv(maxpool2(inp), P["e00"], P["e01"], "act_bn")  # Conv,ReLU,BN
    EN1 = double_conv(maxpool2(EN0), P["e10"], P["e11"], "act_bn")
    EN2 = double_conv(maxpool2(EN1), P["e20"], P["e21"], "act_bn")
    lent = upsample2(double_conv(maxpool2(EN2), P["l0"], P["l1"], "bn_act"))
    DE0 = upsample2(double_conv(jnp.concatenate([EN2, lent], -1),
                                P["d00"], P["d01"], "act_bn"))
    DE1 = upsample2(double_conv(jnp.concatenate([EN1, DE0], -1),
                                P["d10"], P["d11"], "act_bn"))
    DE2 = upsample2(double_conv(jnp.concatenate([EN0, DE1], -1),
                                P["d20"], P["d21"], "act_bn"))
    y = jnp.concatenate([inp, DE2], -1)
    y = conv_bn_act(y, P["o0"], order="bn_act", act="relu")
    y = conv_bn_act(y, P["o1"], order="bn_act", act="relu")
    y = conv_bn_act(y, P["o2"], order="bn_act", act="relu")
    y = conv_bn_act(y, P["o3"], order="bn_act", act="sigmoid",
                    out_dtype=jnp.float32)
    return y


if __name__ == "__main__":
    key = jax.random.PRNGKey(0)
    kx, kp = jax.random.split(key)
    N = 1                                   # U_net_RGB(p=0.1, N=1); dropout p unused in eval
    B, H, W = 2, 16, 16
    x_nchw = jax.random.normal(kx, (B, 3, H, W), jnp.float32)   # PyTorch NCHW input
    x_nhwc = jnp.transpose(x_nchw, (0, 2, 3, 1))                # kernel layout NHWC

    P = init_params(kp, N=N)
    y_nhwc = unet_rgb_forward(x_nhwc, P)
    y_nchw = jnp.transpose(y_nhwc, (0, 3, 1, 2))                # back to NCHW
    jax.block_until_ready(y_nchw)

    assert y_nchw.shape == (B, 1, H, W), y_nchw.shape
    assert bool(jnp.all(jnp.isfinite(y_nchw)))
    assert bool(jnp.all((y_nchw >= 0.0) & (y_nchw <= 1.0)))     # final Sigmoid
    print("KERNEL_OK")
</pallas_src>

<mosaic_0001>
module attributes {stable_mosaic.version = 11 : i64} {
  func.func @_gemm_epilogue_kernel(%arg0: i32, %arg1: i32, %arg2: memref<1x256x27xbf16, #tpu.memory_space<vmem>>, %arg3: memref<27x8xbf16, #tpu.memory_space<vmem>>, %arg4: memref<1x8xf32, #tpu.memory_space<vmem>>, %arg5: memref<1x8xf32, #tpu.memory_space<vmem>>, %arg6: memref<1x8xf32, #tpu.memory_space<vmem>>, %arg7: memref<1x256x8xbf16, #tpu.memory_space<vmem>>) attributes {dimension_semantics = [#tpu.dimension_semantics<parallel>, #tpu.dimension_semantics<parallel>], iteration_bounds = array<i64: 2, 1>, scalar_prefetch = 0 : i64, scratch_operands = 0 : i64, tpu.core_type = #tpu.core_type<tc>, window_params = [{transform_indices = @transform_0, window_bounds = array<i64: 1, 256, 27>}, {pipeline_mode = #tpu.pipeline_mode<synchronous>, transform_indices = @transform_1, window_bounds = array<i64: 27, 8>}, {pipeline_mode = #tpu.pipeline_mode<synchronous>, transform_indices = @transform_2, window_bounds = array<i64: 1, 8>}, {pipeline_mode = #tpu.pipeline_mode<synchronous>, transform_indices = @transform_3, window_bounds = array<i64: 1, 8>}, {pipeline_mode = #tpu.pipeline_mode<synchronous>, transform_indices = @transform_4, window_bounds = array<i64: 1, 8>}, {transform_indices = @transform_5, window_bounds = array<i64: 1, 256, 8>}]} {
    %c0 = arith.constant 0 : index
    %c0_0 = arith.constant 0 : index
    %c0_1 = arith.constant 0 : index
    %0 = vector.load %arg2[%c0, %c0_0, %c0_1] : memref<1x256x27xbf16, #tpu.memory_space<vmem>>, vector<1x256x27xbf16>
    %1 = vector.shape_cast %0 : vector<1x256x27xbf16> to vector<256x27xbf16>
    %c0_2 = arith.constant 0 : index
    %c0_3 = arith.constant 0 : index
    %2 = vector.load %arg3[%c0_2, %c0_3] : memref<27x8xbf16, #tpu.memory_space<vmem>>, vector<27x8xbf16>
    %cst = arith.constant dense<0.000000e+00> : vector<256x8xf32>
    %3 = tpu.matmul %1, %2, %cst {dimension_numbers = #tpu.dot_dimension_numbers<[1], [0], [0], [1], [0, 0, 1, 1], [], []>} : vector<256x27xbf16>, vector<27x8xbf16>, vector<256x8xf32> -> vector<256x8xf32>
    %c0_4 = arith.constant 0 : index
    %c0_5 = arith.constant 0 : index
    %4 = vector.load %arg4[%c0_4, %c0_5] : memref<1x8xf32, #tpu.memory_space<vmem>>, vector<1x8xf32>
    %c0_6 = arith.constant 0 : index
    %c0_7 = arith.constant 0 : index
    %5 = vector.load %arg5[%c0_6, %c0_7] : memref<1x8xf32, #tpu.memory_space<vmem>>, vector<1x8xf32>
    %c0_8 = arith.constant 0 : index
    %c0_9 = arith.constant 0 : index
    %6 = vector.load %arg6[%c0_8, %c0_9] : memref<1x8xf32, #tpu.memory_space<vmem>>, vector<1x8xf32>
    %7 = vector.broadcast %4 : vector<1x8xf32> to vector<256x8xf32>
    %8 = arith.addf %3, %7 : vector<256x8xf32>
    %9 = vector.broadcast %5 : vector<1x8xf32> to vector<256x8xf32>
    %10 = arith.mulf %8, %9 : vector<256x8xf32>
    %11 = vector.broadcast %6 : vector<1x8xf32> to vector<256x8xf32>
    %12 = arith.addf %10, %11 : vector<256x8xf32>
    %cst_10 = arith.constant 0.000000e+00 : f32
    %13 = vector.broadcast %cst_10 : f32 to vector<256x8xf32>
    %14 = arith.maximumf %12, %13 : vector<256x8xf32>
    %15 = arith.truncf %14 : vector<256x8xf32> to vector<256x8xbf16>
    %c0_11 = arith.constant 0 : index
    %c0_12 = arith.constant 0 : index
    %c0_13 = arith.constant 0 : index
    %16 = vector.load %arg7[%c0_11, %c0_12, %c0_13] : memref<1x256x8xbf16, #tpu.memory_space<vmem>>, vector<1x256x8xbf16>
    %17 = vector.shape_cast %16 : vector<1x256x8xbf16> to vector<256x8xbf16>
    %18 = vector.shape_cast %15 : vector<256x8xbf16> to vector<1x256x8xbf16>
    tpu.vector_store %arg7[%c0_11, %c0_12, %c0_13], %18 {strides = array<i32>} : memref<1x256x8xbf16, #tpu.memory_space<vmem>>, vector<1x256x8xbf16>,
    return
  }
  func.func @transform_0(%arg0: i32, %arg1: i32) -> (i32, i32, i32) {
    %c0_i32 = arith.constant 0 : i32
    %c0_i32_0 = arith.constant 0 : i32
    return %arg0, %arg1, %c0_i32 : i32, i32, i32
  }
  func.func @transform_1(%arg0: i32, %arg1: i32) -> (i32, i32) {
    %c0_i32 = arith.constant 0 : i32
    %c0_i32_0 = arith.constant 0 : i32
    %c0_i32_1 = arith.constant 0 : i32
    return %c0_i32, %c0_i32_0 : i32, i32
  }
  func.func @transform_2(%arg0: i32, %arg1: i32) -> (i32, i32) {
    %c0_i32 = arith.constant 0 : i32
    %c0_i32_0 = arith.constant 0 : i32
    %c0_i32_1 = arith.constant 0 : i32
    return %c0_i32, %c0_i32_0 : i32, i32
  }
  func.func @transform_3(%arg0: i32, %arg1: i32) -> (i32, i32) {
    %c0_i32 = arith.constant 0 : i32
    %c0_i32_0 = arith.constant 0 : i32
    %c0_i32_1 = arith.constant 0 : i32
    return %c0_i32, %c0_i32_0 : i32, i32
  }
  func.func @transform_4(%arg0: i32, %arg1: i32) -> (i32, i32) {
    %c0_i32 = arith.constant 0 : i32
    %c0_i32_0 = arith.constant 0 : i32
    %c0_i32_1 = arith.constant 0 : i32
    return %c0_i32, %c0_i32_0 : i32, i32
  }
  func.func @transform_5(%arg0: i32, %arg1: i32) -> (i32, i32, i32) {
    %c0_i32 = arith.constant 0 : i32
    %c0_i32_0 = arith.constant 0 : i32
    return %arg0, %arg1, %c0_i32 : i32, i32, i32
  }
}

</mosaic_0001>

<llo_original>
// kernel: tpu_custom_call.1
$region0: #{tpu_custom_call.1}
  #allocation0 [shape = 'u32[]', space=smem, size = 0x4, offset = 0x4, fixed_abs, tag = 'smem constant byte address 0x4 - core index']
  #allocation1 [shape = 'u32[144,128]{1,0:T(1,128)}', space=vmem, size = 0x12000, scoped, tag = 'internal scratch']
  %s0 = inlined_call_operand.vmem [shape: bf16[2,256,27], index: 0, kind: input, shape index: {}]
  %s1 = inlined_call_operand.vmem [shape: bf16[27,8], index: 1, kind: input, shape index: {}]
  %s2 = inlined_call_operand.vmem [shape: f32[1,8], index: 2, kind: input, shape index: {}]
  %s3 = inlined_call_operand.vmem [shape: f32[1,8], index: 3, kind: input, shape index: {}]
  %s4 = inlined_call_operand.vmem [shape: f32[1,8], index: 4, kind: input, shape index: {}]
  %s5 = inlined_call_operand.vmem [shape: bf16[2,256,8], index: 5, kind: output, shape index: {}]
  %s6 = sld [smem:[#allocation0]]
  $region53: #{tpu_custom_call.1} parent=0
    _
  %s8 = ssub.s32 1, %s6
  %s9 = scalar_select 0, %s8, %s6
  loop: start=0, step=1, limit=4
  $region2: #{tpu_custom_call.1} parent=0 // loop_pre_header
    _
  $region3: #{tpu_custom_call.1} parent=0 // loop_header
    %s11 = sphi 0, %s15
    %p12 = scmp.ge.s32.totalorder %s11, 4
    %s18 = sphi 0, %s30
    %s19 = sphi 0, %s26
    %s20 = sphi 0, %s18
    %s21 = sphi 0, %s19
    %s22 = sphi 0, %s20
    %s23 = sphi 0, %s21
    %s35 = sphi 0, %s37
    %s38 = sphi 0, %s35
    %s39 = sphi 0, %s38
    %s55 = sphi 0, %s39
    %s59 = sphi 0, %s59
    %s61 = sphi 0, %s59
    %s62 = sphi 0, %s61
    %s76 = sphi 0, %s62
    %s80 = sphi 0, %s80
    %s82 = sphi 0, %s80
    %s83 = sphi 0, %s82
    %s97 = sphi 0, %s83
    %s101 = sphi 0, %s101
    %s103 = sphi 0, %s101
    %s104 = sphi 0, %s103
    %s118 = sphi 0, %s104
    %s122 = sphi 0, %s122
    %s124 = sphi 0, %s122
    %s125 = sphi 0, %s124
    %s139 = sphi 0, %s125
    %s147 = sphi 0, %s149
    %s150 = sphi 0, %s147
    %s151 = sphi 0, %s150
    %s167 = sphi 0, %s151
  $region4: #{tpu_custom_call.1} parent=0 // loop_header_branch
    %14 = sbr.rel (%p12) target = $region8
  $region5: #{tpu_custom_call.1} parent=0 // loop_body
    %s16 = ssub.s32 %s11, 1
    %s17 = ssub.s32 %s11, 2
    %s24 = sadd.s32 1, %s19
    %p25 = scmp.ge.s32.totalorder %s24, 1
    %s26 = scalar_select %p25, 0, %s24
    %s27 = sadd.s32 1, %s18
    %s28 = scalar_select %p25, %s27, %s18
    %p29 = scmp.ge.s32.totalorder %s28, 2
    %s30 = scalar_select %p29, 0, %s28
    %s31 = ssub.s32 %s18, %s30
    %s32 = ssub.s32 %s19, %s26
    %s33 = sor.u32 %s31, %s32
    %p34 = scmp.eq.s32.totalorder %s33, 0
    %s36 = sadd.s32 %s35, 1
    %s37 = scalar_select %p34, %s35, %s36
    %p40 = pneg %p34
    %p41 = scmp.eq.s32.totalorder %s11, 1
    %p42 = por %p40, %p41
    %p43 = scmp.ne.s32.totalorder %s35, %s38
    %p44 = scmp.eq.s32.totalorder %s11, 0
    %p45 = por %p43, %p44
    %p46 = scmp.ne.s32.totalorder %s35, %s38
    %p47 = scmp.eq.s32.totalorder %s16, 1
    %p48 = por %p46, %p47
    %p49 = scmp.ne.s32.totalorder %s38, %s39
    %p50 = scmp.eq.s32.totalorder %s16, 0
    %p51 = por %p49, %p50
    %p52 = scmp.ne.s32.totalorder %s38, %s39
    %p53 = scmp.eq.s32.totalorder %s17, 1
    %p54 = por %p52, %p53
    %p56 = scmp.ne.s32.totalorder %s39, %s55
    %p57 = scmp.eq.s32.totalorder %s17, 0
    %p58 = por %p56, %p57
    %s60 = sadd.s32 %s59, 1
    %p63 = scmp.eq.s32.totalorder %s11, 1
    %p64 = scmp.ne.s32.totalorder %s59, %s61
    %p65 = scmp.eq.s32.totalorder %s11, 0
    %p66 = por %p64, %p65
    %p67 = scmp.ne.s32.totalorder %s59, %s61
    %p68 = scmp.eq.s32.totalorder %s16, 1
    %p69 = por %p67, %p68
    %p70 = scmp.ne.s32.totalorder %s61, %s62
    %p71 = scmp.eq.s32.totalorder %s16, 0
    %p72 = por %p70, %p71
    %p73 = scmp.ne.s32.totalorder %s61, %s62
    %p74 = scmp.eq.s32.totalorder %s17, 1
    %p75 = por %p73, %p74
    %p77 = scmp.ne.s32.totalorder %s62, %s76
    %p78 = scmp.eq.s32.totalorder %s17, 0
    %p79 = por %p77, %p78
    %s81 = sadd.s32 %s80, 1
    %p84 = scmp.eq.s32.totalorder %s11, 1
    %p85 = scmp.ne.s32.totalorder %s80, %s82
    %p86 = scmp.eq.s32.totalorder %s11, 0
    %p87 = por %p85, %p86
    %p88 = scmp.ne.s32.totalorder %s80, %s82
    %p89 = scmp.eq.s32.totalorder %s16, 1
    %p90 = por %p88, %p89
    %p91 = scmp.ne.s32.totalorder %s82, %s83
    %p92 = scmp.eq.s32.totalorder %s16, 0
    %p93 = por %p91, %p92
    %p94 = scmp.ne.s32.totalorder %s82, %s83
    %p95 = scmp.eq.s32.totalorder %s17, 1
    %p96 = por %p94, %p95
    %p98 = scmp.ne.s32.totalorder %s83, %s97
    %p99 = scmp.eq.s32.totalorder %s17, 0
    %p100 = por %p98, %p99
    %s102 = sadd.s32 %s101, 1
    %p105 = scmp.eq.s32.totalorder %s11, 1
    %p106 = scmp.ne.s32.totalorder %s101, %s103
    %p107 = scmp.eq.s32.totalorder %s11, 0
    %p108 = por %p106, %p107
    %p109 = scmp.ne.s32.totalorder %s101, %s103
    %p110 = scmp.eq.s32.totalorder %s16, 1
    %p111 = por %p109, %p110
    %p112 = scmp.ne.s32.totalorder %s103, %s104
    %p113 = scmp.eq.s32.totalorder %s16, 0
    %p114 = por %p112, %p113
    %p115 = scmp.ne.s32.totalorder %s103, %s104
    %p116 = scmp.eq.s32.totalorder %s17, 1
    %p117 = por %p115, %p116
    %p119 = scmp.ne.s32.totalorder %s104, %s118
    %p120 = scmp.eq.s32.totalorder %s17, 0
    %p121 = por %p119, %p120
    %s123 = sadd.s32 %s122, 1
    %p126 = scmp.eq.s32.totalorder %s11, 1
    %p127 = scmp.ne.s32.totalorder %s122, %s124
    %p128 = scmp.eq.s32.totalorder %s11, 0
    %p129 = por %p127, %p128
    %p130 = scmp.ne.s32.totalorder %s122, %s124
    %p131 = scmp.eq.s32.totalorder %s16, 1
    %p132 = por %p130, %p131
    %p133 = scmp.ne.s32.totalorder %s124, %s125
    %p134 = scmp.eq.s32.totalorder %s16, 0
    %p135 = por %p133, %p134
    %p136 = scmp.ne.s32.totalorder %s124, %s125
    %p137 = scmp.eq.s32.totalorder %s17, 1
    %p138 = por %p136, %p137
    %p140 = scmp.ne.s32.totalorder %s125, %s139
    %p141 = scmp.eq.s32.totalorder %s17, 0
    %p142 = por %p140, %p141
    %s143 = ssub.s32 %s18, %s30
    %s144 = ssub.s32 %s19, %s26
    %s145 = sor.u32 %s143, %s144
    %p146 = scmp.eq.s32.totalorder %s145, 0
    %s148 = sadd.s32 %s147, 1
    %s149 = scalar_select %p146, %s147, %s148
    %p152 = pneg %p146
    %p153 = scmp.eq.s32.totalorder %s11, 1
    %p154 = por %p152, %p153
    %p155 = scmp.ne.s32.totalorder %s147, %s150
    %p156 = scmp.eq.s32.totalorder %s11, 0
    %p157 = por %p155, %p156
    %p158 = scmp.ne.s32.totalorder %s147, %s150
    %p159 = scmp.eq.s32.totalorder %s16, 1
    %p160 = por %p158, %p159
    %p161 = scmp.ne.s32.totalorder %s150, %s151
    %p162 = scmp.eq.s32.totalorder %s16, 0
    %p163 = por %p161, %p162
    %p164 = scmp.ne.s32.totalorder %s150, %s151
    %p165 = scmp.eq.s32.totalorder %s17, 1
    %p166 = por %p164, %p165
    %p168 = scmp.ne.s32.totalorder %s151, %s167
    %p169 = scmp.eq.s32.totalorder %s17, 0
    %p170 = por %p168, %p169
    %p171 = scmp.le.s32.totalorder 1, %s11
    %p172 = scmp.lt.s32.totalorder %s11, 3
    %p173 = pnand %p171, %p172
    %p174 = pneg %p173
    // Predicated region
    $region9: #{tpu_custom_call.1} parent=5 // pred_check
      _
    $region10: #{tpu_custom_call.1} parent=5 // pred_check_branch
      %176 = sbr.rel (%p173) target = $region12
    $region11: #{tpu_custom_call.1} parent=5 // pred_region
      %s177 = ssub.s32 %s11, 1
      // Predicated region
      $region13: #{tpu_custom_call.1} parent=11 // pred_check
        %p178 = pneg %p72
      $region14: #{tpu_custom_call.1} parent=11 // pred_check_branch
        %180 = sbr.rel (%p178) target = $region16
      $region15: #{tpu_custom_call.1} parent=11 // pred_region
        _
      $region16: #{tpu_custom_call.1} parent=11 // pred_fallthru
        _
      // Predicated region
      $region17: #{tpu_custom_call.1} parent=11 // pred_check
        %p181 = pneg %p93
      $region18: #{tpu_custom_call.1} parent=11 // pred_check_branch
        %183 = sbr.rel (%p181) target = $region20
      $region19: #{tpu_custom_call.1} parent=11 // pred_region
        _
      $region20: #{tpu_custom_call.1} parent=11 // pred_fallthru
        _
      // Predicated region
      $region21: #{tpu_custom_call.1} parent=11 // pred_check
        %p184 = pneg %p114
      $region22: #{tpu_custom_call.1} parent=11 // pred_check_branch
        %186 = sbr.rel (%p184) target = $region24
      $region23: #{tpu_custom_call.1} parent=11 // pred_region
        _
      $region24: #{tpu_custom_call.1} parent=11 // pred_fallthru
        _
      // Predicated region
      $region25: #{tpu_custom_call.1} parent=11 // pred_check
        %p187 = pneg %p135
      $region26: #{tpu_custom_call.1} parent=11 // pred_check_branch
        %189 = sbr.rel (%p187) target = $region28
      $region27: #{tpu_custom_call.1} parent=11 // pred_region
        _
      $region28: #{tpu_custom_call.1} parent=11 // pred_fallthru
        _
    $region12: #{tpu_custom_call.1} parent=5 // pred_fallthru
      _
    %p190 = scmp.lt.s32.totalorder %s11, 2
    // Predicated region
    $region29: #{tpu_custom_call.1} parent=5 // pred_check
      %p191 = pneg %p190
    $region30: #{tpu_custom_call.1} parent=5 // pred_check_branch
      %193 = sbr.rel (%p191) target = $region32
    $region31: #{tpu_custom_call.1} parent=5 // pred_region
      // Predicated region
      $region33: #{tpu_custom_call.1} parent=31 // pred_check
        %p194 = pneg %p45
      $region34: #{tpu_custom_call.1} parent=31 // pred_check_branch
        %196 = sbr.rel (%p194) target = $region36
      $region35: #{tpu_custom_call.1} parent=31 // pred_region
        %s197 = smul.u32 32, %s19
        %p198 = scmp.lt.s32.totalorder %s18, 1
        %s199 = scalar_select %p198, %s18, 1
        %p200 = scmp.lt.s32.totalorder %s197, 31
        %s201 = scalar_select %p200, %s197, 31
        %s202 = smul.addr %s199, 32
        %s203 = sadd.s32 %s201, %s202
        %s204 = smul.addr %s203, 4
        %s205 = scalar_lea.vmem %s0, %s204
        %s206 = smul.u32 32, %s19
      $region36: #{tpu_custom_call.1} parent=31 // pred_fallthru
        _
    $region32: #{tpu_custom_call.1} parent=5 // pred_fallthru
      _
    %p207 = scmp.le.s32.totalorder 1, %s11
    %p208 = scmp.lt.s32.totalorder %s11, 3
    %p209 = pnand %p207, %p208
    %p210 = pneg %p209
    // Predicated region
    $region37: #{tpu_custom_call.1} parent=5 // pred_check
      _
    $region38: #{tpu_custom_call.1} parent=5 // pred_check_branch
      %212 = sbr.rel (%p209) target = $region40
    $region39: #{tpu_custom_call.1} parent=5 // pred_region
      %s213 = ssub.s32 %s11, 1
      %s214 = smul.u32 32, %s21
      %p215 = scmp.lt.s32.totalorder %s20, 1
      %s216 = scalar_select %p215, %s20, 1
      %p217 = scmp.lt.s32.totalorder %s214, 31
      %s218 = scalar_select %p217, %s214, 31
      %s219 = smul.addr %s216, 32
      %s220 = sadd.s32 %s218, %s219
      %s221 = smul.addr %s220, 4
      %s222 = scalar_lea.vmem %s0, %s221
      %p223 = pneg %p51
      %p224 = pneg %p48
      %p225 = pneg %p72
      %p226 = pneg %p69
      %p227 = pneg %p93
      %p228 = pneg %p90
      %p229 = pneg %p114
      %p230 = pneg %p111
      %p231 = pneg %p135
      %p232 = pneg %p132
      %p233 = pneg %p163
      %p234 = pneg %p160
      %s235 = smul.u32 32, %s21
      %p236 = scmp.lt.s32.totalorder %s20, 1
      %s237 = scalar_select %p236, %s20, 1
      %p238 = scmp.lt.s32.totalorder %s235, 31
      %s239 = scalar_select %p238, %s235, 31
      %s240 = smul.addr %s237, 32
      %s241 = sadd.s32 %s239, %s240
      %s242 = smul.addr %s241, 4
      %s243 = scalar_lea.vmem %s5, %s242
      %s244 = smul.u32 32, %s21
      %p245 = scmp.lt.s32.totalorder %s20, 1
      %s246 = scalar_select %p245, %s20, 1
      %p247 = scmp.lt.s32.totalorder %s244, 31
      %s248 = scalar_select %p247, %s244, 31
      %s249 = smul.addr %s246, 32
      %s250 = sadd.s32 %s248, %s249
      %s251 = smul.addr %s250, 4
      %s252 = scalar_lea.vmem %s0, %s251
      %s253 = smul.u32 32, %s21
      %s254 = smul.u32 32, %s21
      %p255 = scmp.lt.s32.totalorder %s20, 1
      %s256 = scalar_select %p255, %s20, 1
      %p257 = scmp.lt.s32.totalorder %s254, 31
      %s258 = scalar_select %p257, %s254, 31
      %s259 = smul.addr %s256, 32
      %s260 = sadd.s32 %s258, %s259
      %s261 = smul.addr %s260, 4
      %s262 = scalar_lea.vmem %s5, %s261
      %s263 = smul.u32 32, %s21
      %v265 = vld [vmem:[%s252] sm:$0xf]
      %v266 = vld [vmem:[%s252 + $0x4] sm:$0xf]
      %v267 = vld [vmem:[%s252 + $0x8] sm:$0xf]
      %v268 = vld [vmem:[%s252 + $0xc] sm:$0xf]
      %v269 = vld [vmem:[%s252 + $0x10] sm:$0xf]
      %v270 = vld [vmem:[%s252 + $0x14] sm:$0xf]
      %v271 = vld [vmem:[%s252 + $0x18] sm:$0xf]
      %v272 = vld [vmem:[%s252 + $0x1c] sm:$0xf]
      %v273 = vld [vmem:[%s252 + $0x20] sm:$0xf]
      %v274 = vld [vmem:[%s252 + $0x24] sm:$0xf]
      %v275 = vld [vmem:[%s252 + $0x28] sm:$0xf]
      %v276 = vld [vmem:[%s252 + $0x2c] sm:$0xf]
      %v277 = vld [vmem:[%s252 + $0x30] sm:$0xf]
      %v278 = vld [vmem:[%s252 + $0x34] sm:$0xf]
      %v279 = vld [vmem:[%s252 + $0x38] sm:$0xf]
      %v280 = vld [vmem:[%s252 + $0x3c] sm:$0xf]
      %v281 = vld [vmem:[%s252 + $0x40] sm:$0xf]
      %v282 = vld [vmem:[%s252 + $0x44] sm:$0xf]
      %v283 = vld [vmem:[%s252 + $0x48] sm:$0xf]
      %v284 = vld [vmem:[%s252 + $0x4c] sm:$0xf]
      %v285 = vld [vmem:[%s252 + $0x50] sm:$0xf]
      %v286 = vld [vmem:[%s252 + $0x54] sm:$0xf]
      %v287 = vld [vmem:[%s252 + $0x58] sm:$0xf]
      %v288 = vld [vmem:[%s252 + $0x5c] sm:$0xf]
      %v289 = vld [vmem:[%s252 + $0x60] sm:$0xf]
      %v290 = vld [vmem:[%s252 + $0x64] sm:$0xf]
      %v291 = vld [vmem:[%s252 + $0x68] sm:$0xf]
      %v292 = vld [vmem:[%s252 + $0x6c] sm:$0xf]
      %v293 = vld [vmem:[%s252 + $0x70] sm:$0xf]
      %v294 = vld [vmem:[%s252 + $0x74] sm:$0xf]
      %v295 = vld [vmem:[%s252 + $0x78] sm:$0xf]
      %v296 = vld [vmem:[%s252 + $0x7c] sm:$0xf]
      %v297 = vld [vmem:[%s1] sm:$0xf]
      %v298 = vld [vmem:[%s1 + $0x4] sm:$0xf]
      %v299 = vld [vmem:[%s1 + $0x8] sm:$0xf]
      %v300 = vld [vmem:[%s1 + $0xc] sm:$0x3]
      %v301 = vld [vmem:[%s2] sm:$0x1]
      %v302 = vld [vmem:[%s3] sm:$0x1]
      %v303 = vld [vmem:[%s4] sm:$0x1]
      %v305 = vlaneseq
      %v306 = vshrl.u32 %v305, 7
      %v307 = vsub.s32 0, %v306
      %v308 = vrot.slane %v301, %v307
      %v342 = vunpack.c.l.b16 %v265
      %v343 = vunpack.c.l.b16 %v266
      %v344 = vunpack.c.l.b16 %v267
      %v345 = vunpack.c.l.b16 %v268
      %v346 = vunpack.c.l.b16 %v269
      %v347 = vunpack.c.l.b16 %v270
      %v348 = vunpack.c.l.b16 %v271
      %v349 = vunpack.c.l.b16 %v272
      %v350 = vunpack.c.l.b16 %v273
      %v351 = vunpack.c.l.b16 %v274
      %v352 = vunpack.c.l.b16 %v275
      %v353 = vunpack.c.l.b16 %v276
      %v354 = vunpack.c.l.b16 %v277
      %v355 = vunpack.c.l.b16 %v278
      %v356 = vunpack.c.l.b16 %v279
      %v357 = vunpack.c.l.b16 %v280
      %v358 = vunpack.c.l.b16 %v281
      %v359 = vunpack.c.l.b16 %v282
      %v360 = vunpack.c.l.b16 %v283
      %v361 = vunpack.c.l.b16 %v284
      %v362 = vunpack.c.l.b16 %v285
      %v363 = vunpack.c.l.b16 %v286
      %v364 = vunpack.c.l.b16 %v287
      %v365 = vunpack.c.l.b16 %v288
      %v366 = vunpack.c.l.b16 %v289
      %v367 = vunpack.c.l.b16 %v290
      %v368 = vunpack.c.l.b16 %v291
      %v369 = vunpack.c.l.b16 %v292
      %v370 = vunpack.c.l.b16 %v293
      %v371 = vunpack.c.l.b16 %v294
      %v372 = vunpack.c.l.b16 %v295
      %v373 = vunpack.c.l.b16 %v296
      %v374 = vpack.c.b16 %v343, %v342
      %v375 = vpack.c.b16 %v345, %v344
      %v376 = vpack.c.b16 %v347, %v346
      %v377 = vpack.c.b16 %v349, %v348
      %v378 = vpack.c.b16 %v351, %v350
      %v379 = vpack.c.b16 %v353, %v352
      %v380 = vpack.c.b16 %v355, %v354
      %v381 = vpack.c.b16 %v357, %v356
      %v382 = vpack.c.b16 %v359, %v358
      %v383 = vpack.c.b16 %v361, %v360
      %v384 = vpack.c.b16 %v363, %v362
      %v385 = vpack.c.b16 %v365, %v364
      %v386 = vpack.c.b16 %v367, %v366
      %v387 = vpack.c.b16 %v369, %v368
      %v388 = vpack.c.b16 %v371, %v370
      %v389 = vpack.c.b16 %v373, %v372
      %v394 = vunpack.c.l.b16 %v297
      %v395 = vunpack.c.l.b16 %v298
      %v396 = vunpack.c.l.b16 %v299
      %v397 = vunpack.c.l.b16 %v300
      %v398 = vpack.c.b16 %v395, %v394
      %v399 = vpack.c.b16 %v397, %v396
      %vm401 = vcmask 220160
      %v403 = vsel %vm401, %v374, 0
      %v406 = vsel %vm401, %v375, 0
      %v409 = vsel %vm401, %v376, 0
      %v412 = vsel %vm401, %v377, 0
      %v415 = vsel %vm401, %v378, 0
      %v418 = vsel %vm401, %v379, 0
      %v421 = vsel %vm401, %v380, 0
      %v424 = vsel %vm401, %v381, 0
      %v427 = vsel %vm401, %v382, 0
      %v430 = vsel %vm401, %v383, 0
      %v433 = vsel %vm401, %v384, 0
      %v436 = vsel %vm401, %v385, 0
      %v439 = vsel %vm401, %v386, 0
      %v442 = vsel %vm401, %v387, 0
      %v445 = vsel %vm401, %v388, 0
      %v448 = vsel %vm401, %v389, 0
      %vm450 = vcmask 1044480
      %vm451 = vcmask 1045504
      %v452 = vsel %vm450, 4294967295, 65535
      %v453 = vsel %vm451, %v452, 0
      %v455 = vand.u32 %v399, %v453
      %457 = vmatprep.subr.bf16.mxu0 0
      %458 = vmatpush1.bf16.msra.mxu0 0
      %459 = vmatprep.subr.bf16.mxu0 0
      %460 = vmatpush1.bf16.msra.mxu0 0
      %461 = vmatprep.subr.bf16.mxu0 0
      %462 = vmatpush1.bf16.msra.mxu0 0
      %463 = vmatprep.subr.bf16.mxu0 0
      %464 = vmatpush1.bf16.msra.mxu0 0
      %465 = vmatprep.subr.bf16.mxu0 0
      %466 = vmatpush1.bf16.msra.mxu0 0
      %467 = vmatprep.subr.bf16.mxu0 0
      %468 = vmatpush1.bf16.msra.mxu0 0
      %469 = vmatprep.subr.bf16.mxu0 0
      %470 = vmatpush1.bf16.msra.mxu0 %v455
      %471 = vmatprep.subr.bf16.mxu0 0
      %472 = vmatpush1.bf16.msra.mxu0 %v398
      %473 = vmatprep.subr.bf16.mxu0 0
      %474 = vmatpush2.bf16.msra.mxu0 0
      %475 = vmatprep.subr.bf16.mxu0 0
      %476 = vmatpush2.bf16.msra.mxu0 0
      %477 = vmatprep.subr.bf16.mxu0 0
      %478 = vmatpush2.bf16.msra.mxu0 0
      %479 = vmatprep.subr.bf16.mxu0 0
      %480 = vmatpush2.bf16.msra.mxu0 0
      %481 = vmatprep.subr.bf16.mxu0 0
      %482 = vmatpush2.bf16.msra.mxu0 0
      %483 = vmatprep.subr.bf16.mxu0 0
      %484 = vmatpush2.bf16.msra.mxu0 0
      %485 = vmatprep.subr.bf16.mxu0 0
      %486 = vmatpush2.bf16.msra.mxu0 0
      %487 = vmatprep.subr.bf16.mxu0 0
      %488 = vmatpush2.bf16.msra.mxu0 0
      %489 = vmatprep.mubr.bf16.mxu0 0
      %490 = vmatmul.mubr.bf16.gmra.mxu0 %v403
      %v491 = vpop.f32.mrf.mxu0
      %v492 = vadd.f32 %v308, %v491
      %v493 = vpop.f32.mrf.mxu0
      %v494 = vpop.f32.mrf.mxu0
      %v495 = vadd.f32 %v308, %v494
      %v496 = vpop.f32.mrf.mxu0
      %497 = vmatprep.mubr.bf16.mxu0 0
      %498 = vmatmul.mubr.bf16.gmra.mxu0 %v406
      %v499 = vpop.f32.mrf.mxu0
      %v500 = vadd.f32 %v308, %v499
      %v501 = vpop.f32.mrf.mxu0
      %v502 = vpop.f32.mrf.mxu0
      %v503 = vadd.f32 %v308, %v502
      %v504 = vpop.f32.mrf.mxu0
      %505 = vmatprep.mubr.bf16.mxu0 0
      %506 = vmatmul.mubr.bf16.gmra.mxu0 %v409
      %v507 = vpop.f32.mrf.mxu0
      %v508 = vadd.f32 %v308, %v507
      %v509 = vpop.f32.mrf.mxu0
      %v510 = vpop.f32.mrf.mxu0
      %v511 = vadd.f32 %v308, %v510
      %v512 = vpop.f32.mrf.mxu0
      %513 = vmatprep.mubr.bf16.mxu0 0
      %514 = vmatmul.mubr.bf16.gmra.mxu0 %v412
      %v515 = vpop.f32.mrf.mxu0
      %v516 = vadd.f32 %v308, %v515
      %v517 = vpop.f32.mrf.mxu0
      %v518 = vpop.f32.mrf.mxu0
      %v519 = vadd.f32 %v308, %v518
      %v520 = vpop.f32.mrf.mxu0
      %521 = vmatprep.mubr.bf16.mxu0 0
      %522 = vmatmul.mubr.bf16.gmra.mxu0 %v415
      %v523 = vpop.f32.mrf.mxu0
      %v524 = vadd.f32 %v308, %v523
      %v525 = vpop.f32.mrf.mxu0
      %v526 = vpop.f32.mrf.mxu0
      %v527 = vadd.f32 %v308, %v526
      %v528 = vpop.f32.mrf.mxu0
      %529 = vmatprep.mubr.bf16.mxu0 0
      %530 = vmatmul.mubr.bf16.gmra.mxu0 %v418
      %v531 = vpop.f32.mrf.mxu0
      %v532 = vadd.f32 %v308, %v531
      %v533 = vpop.f32.mrf.mxu0
      %v534 = vpop.f32.mrf.mxu0
      %v535 = vadd.f32 %v308, %v534
      %v536 = vpop.f32.mrf.mxu0
      %537 = vmatprep.mubr.bf16.mxu0 0
      %538 = vmatmul.mubr.bf16.gmra.mxu0 %v421
      %v539 = vpop.f32.mrf.mxu0
      %v540 = vadd.f32 %v308, %v539
      %v541 = vpop.f32.mrf.mxu0
      %v542 = vpop.f32.mrf.mxu0
      %v543 = vadd.f32 %v308, %v542
      %v544 = vpop.f32.mrf.mxu0
      %545 = vmatprep.mubr.bf16.mxu0 0
      %546 = vmatmul.mubr.bf16.gmra.mxu0 %v424
      %v547 = vpop.f32.mrf.mxu0
      %v548 = vadd.f32 %v308, %v547
      %v549 = vpop.f32.mrf.mxu0
      %v550 = vpop.f32.mrf.mxu0
      %v551 = vadd.f32 %v308, %v550
      %v552 = vpop.f32.mrf.mxu0
      %553 = vmatprep.mubr.bf16.mxu0 0
      %554 = vmatmul.mubr.bf16.gmra.mxu0 %v427
      %v555 = vpop.f32.mrf.mxu0
      %v556 = vadd.f32 %v308, %v555
      %v557 = vpop.f32.mrf.mxu0
      %v558 = vpop.f32.mrf.mxu0
      %v559 = vadd.f32 %v308, %v558
      %v560 = vpop.f32.mrf.mxu0
      %561 = vmatprep.mubr.bf16.mxu0 0
      %562 = vmatmul.mubr.bf16.gmra.mxu0 %v430
      %v563 = vpop.f32.mrf.mxu0
      %v564 = vadd.f32 %v308, %v563
      %v565 = vpop.f32.mrf.mxu0
      %v566 = vpop.f32.mrf.mxu0
      %v567 = vadd.f32 %v308, %v566
      %v568 = vpop.f32.mrf.mxu0
      %569 = vmatprep.mubr.bf16.mxu0 0
      %570 = vmatmul.mubr.bf16.gmra.mxu0 %v433
      %v571 = vpop.f32.mrf.mxu0
      %v572 = vadd.f32 %v308, %v571
      %v573 = vpop.f32.mrf.mxu0
      %v574 = vpop.f32.mrf.mxu0
      %v575 = vadd.f32 %v308, %v574
      %v576 = vpop.f32.mrf.mxu0
      %577 = vmatprep.mubr.bf16.mxu0 0
      %578 = vmatmul.mubr.bf16.gmra.mxu0 %v436
      %v579 = vpop.f32.mrf.mxu0
      %v580 = vadd.f32 %v308, %v579
      %v581 = vpop.f32.mrf.mxu0
      %v582 = vpop.f32.mrf.mxu0
      %v583 = vadd.f32 %v308, %v582
      %v584 = vpop.f32.mrf.mxu0
      %585 = vmatprep.mubr.bf16.mxu0 0
      %586 = vmatmul.mubr.bf16.gmra.mxu0 %v439
      %v587 = vpop.f32.mrf.mxu0
      %v588 = vadd.f32 %v308, %v587
      %v589 = vpop.f32.mrf.mxu0
      %v590 = vpop.f32.mrf.mxu0
      %v591 = vadd.f32 %v308, %v590
      %v592 = vpop.f32.mrf.mxu0
      %593 = vmatprep.mubr.bf16.mxu0 0
      %594 = vmatmul.mubr.bf16.gmra.mxu0 %v442
      %v595 = vpop.f32.mrf.mxu0
      %v596 = vadd.f32 %v308, %v595
      %v597 = vpop.f32.mrf.mxu0
      %v598 = vpop.f32.mrf.mxu0
      %v599 = vadd.f32 %v308, %v598
      %v600 = vpop.f32.mrf.mxu0
      %601 = vmatprep.mubr.bf16.mxu0 0
      %602 = vmatmul.mubr.bf16.gmra.mxu0 %v445
      %v603 = vpop.f32.mrf.mxu0
      %v604 = vadd.f32 %v308, %v603
      %v605 = vpop.f32.mrf.mxu0
      %v606 = vpop.f32.mrf.mxu0
      %v607 = vadd.f32 %v308, %v606
      %v608 = vpop.f32.mrf.mxu0
      %609 = vmatprep.mubr.bf16.mxu0 0
      %610 = vmatmul.mubr.bf16.gmra.mxu0 %v448
      %v611 = vpop.f32.mrf.mxu0
      %v612 = vadd.f32 %v308, %v611
      %v613 = vpop.f32.mrf.mxu0
      %v614 = vpop.f32.mrf.mxu0
      %v615 = vadd.f32 %v308, %v614
      %v616 = vpop.f32.mrf.mxu0
      %617 = vdwg.mxu0
      %v619 = vlaneseq
      %v620 = vshrl.u32 %v619, 7
      %v621 = vsub.s32 0, %v620
      %v622 = vrot.slane %v302, %v621
      %v624 = vmul.f32 %v492, %v622
      %v625 = vmul.f32 %v495, %v622
      %v626 = vmul.f32 %v500, %v622
      %v627 = vmul.f32 %v503, %v622
      %v628 = vmul.f32 %v508, %v622
      %v629 = vmul.f32 %v511, %v622
      %v630 = vmul.f32 %v516, %v622
      %v631 = vmul.f32 %v519, %v622
      %v632 = vmul.f32 %v524, %v622
      %v633 = vmul.f32 %v527, %v622
      %v634 = vmul.f32 %v532, %v622
      %v635 = vmul.f32 %v535, %v622
      %v636 = vmul.f32 %v540, %v622
      %v637 = vmul.f32 %v543, %v622
      %v638 = vmul.f32 %v548, %v622
      %v639 = vmul.f32 %v551, %v622
      %v640 = vmul.f32 %v556, %v622
      %v641 = vmul.f32 %v559, %v622
      %v642 = vmul.f32 %v564, %v622
      %v643 = vmul.f32 %v567, %v622
      %v644 = vmul.f32 %v572, %v622
      %v645 = vmul.f32 %v575, %v622
      %v646 = vmul.f32 %v580, %v622
      %v647 = vmul.f32 %v583, %v622
      %v648 = vmul.f32 %v588, %v622
      %v649 = vmul.f32 %v591, %v622
      %v650 = vmul.f32 %v596, %v622
      %v651 = vmul.f32 %v599, %v622
      %v652 = vmul.f32 %v604, %v622
      %v653 = vmul.f32 %v607, %v622
      %v654 = vmul.f32 %v612, %v622
      %v655 = vmul.f32 %v615, %v622
      %v657 = vlaneseq
      %v658 = vshrl.u32 %v657, 7
      %v659 = vsub.s32 0, %v658
      %v660 = vrot.slane %v303, %v659
      %v662 = vadd.f32 %v624, %v660
      %v663 = vadd.f32 %v625, %v660
      %v664 = vadd.f32 %v626, %v660
      %v665 = vadd.f32 %v627, %v660
      %v666 = vadd.f32 %v628, %v660
      %v667 = vadd.f32 %v629, %v660
      %v668 = vadd.f32 %v630, %v660
      %v669 = vadd.f32 %v631, %v660
      %v670 = vadd.f32 %v632, %v660
      %v671 = vadd.f32 %v633, %v660
      %v672 = vadd.f32 %v634, %v660
      %v673 = vadd.f32 %v635, %v660
      %v674 = vadd.f32 %v636, %v660
      %v675 = vadd.f32 %v637, %v660
      %v676 = vadd.f32 %v638, %v660
      %v677 = vadd.f32 %v639, %v660
      %v678 = vadd.f32 %v640, %v660
      %v679 = vadd.f32 %v641, %v660
      %v680 = vadd.f32 %v642, %v660
      %v681 = vadd.f32 %v643, %v660
      %v682 = vadd.f32 %v644, %v660
      %v683 = vadd.f32 %v645, %v660
      %v684 = vadd.f32 %v646, %v660
      %v685 = vadd.f32 %v647, %v660
      %v686 = vadd.f32 %v648, %v660
      %v687 = vadd.f32 %v649, %v660
      %v688 = vadd.f32 %v650, %v660
      %v689 = vadd.f32 %v651, %v660
      %v690 = vadd.f32 %v652, %v660
      %v691 = vadd.f32 %v653, %v660
      %v692 = vadd.f32 %v654, %v660
      %v693 = vadd.f32 %v655, %v660
      %v694 = vmax.f32 %v662, 0.0
      %v695 = vmax.f32 %v663, 0.0
      %v696 = vmax.f32 %v664, 0.0
      %v697 = vmax.f32 %v665, 0.0
      %v698 = vmax.f32 %v666, 0.0
      %v699 = vmax.f32 %v667, 0.0
      %v700 = vmax.f32 %v668, 0.0
      %v701 = vmax.f32 %v669, 0.0
      %v702 = vmax.f32 %v670, 0.0
      %v703 = vmax.f32 %v671, 0.0
      %v704 = vmax.f32 %v672, 0.0
      %v705 = vmax.f32 %v673, 0.0
      %v706 = vmax.f32 %v674, 0.0
      %v707 = vmax.f32 %v675, 0.0
      %v708 = vmax.f32 %v676, 0.0
      %v709 = vmax.f32 %v677, 0.0
      %v710 = vmax.f32 %v678, 0.0
      %v711 = vmax.f32 %v679, 0.0
      %v712 = vmax.f32 %v680, 0.0
      %v713 = vmax.f32 %v681, 0.0
      %v714 = vmax.f32 %v682, 0.0
      %v715 = vmax.f32 %v683, 0.0
      %v716 = vmax.f32 %v684, 0.0
      %v717 = vmax.f32 %v685, 0.0
      %v718 = vmax.f32 %v686, 0.0
      %v719 = vmax.f32 %v687, 0.0
      %v720 = vmax.f32 %v688, 0.0
      %v721 = vmax.f32 %v689, 0.0
      %v722 = vmax.f32 %v690, 0.0
      %v723 = vmax.f32 %v691, 0.0
      %v724 = vmax.f32 %v692, 0.0
      %v725 = vmax.f32 %v693, 0.0
      %v726 = vpack.c.bf16 %v695, %v694
      %v727 = vpack.c.bf16 %v697, %v696
      %v728 = vpack.c.bf16 %v699, %v698
      %v729 = vpack.c.bf16 %v701, %v700
      %v730 = vpack.c.bf16 %v703, %v702
      %v731 = vpack.c.bf16 %v705, %v704
      %v732 = vpack.c.bf16 %v707, %v706
      %v733 = vpack.c.bf16 %v709, %v708
      %v734 = vpack.c.bf16 %v711, %v710
      %v735 = vpack.c.bf16 %v713, %v712
      %v736 = vpack.c.bf16 %v715, %v714
      %v737 = vpack.c.bf16 %v717, %v716
      %v738 = vpack.c.bf16 %v719, %v718
      %v739 = vpack.c.bf16 %v721, %v720
      %v740 = vpack.c.bf16 %v723, %v722
      %v741 = vpack.c.bf16 %v725, %v724
      %v758 = vunpack.c.l.b16 %v726
      %v759 = vunpack.c.h.b16 %v726
      %v760 = vunpack.c.l.b16 %v727
      %v761 = vunpack.c.h.b16 %v727
      %v762 = vunpack.c.l.b16 %v728
      %v763 = vunpack.c.h.b16 %v728
      %v764 = vunpack.c.l.b16 %v729
      %v765 = vunpack.c.h.b16 %v729
      %v766 = vunpack.c.l.b16 %v730
      %v767 = vunpack.c.h.b16 %v730
      %v768 = vunpack.c.l.b16 %v731
      %v769 = vunpack.c.h.b16 %v731
      %v770 = vunpack.c.l.b16 %v732
      %v771 = vunpack.c.h.b16 %v732
      %v772 = vunpack.c.l.b16 %v733
      %v773 = vunpack.c.h.b16 %v733
      %v774 = vunpack.c.l.b16 %v734
      %v775 = vunpack.c.h.b16 %v734
      %v776 = vunpack.c.l.b16 %v735
      %v777 = vunpack.c.h.b16 %v735
      %v778 = vunpack.c.l.b16 %v736
      %v779 = vunpack.c.h.b16 %v736
      %v780 = vunpack.c.l.b16 %v737
      %v781 = vunpack.c.h.b16 %v737
      %v782 = vunpack.c.l.b16 %v738
      %v783 = vunpack.c.h.b16 %v738
      %v784 = vunpack.c.l.b16 %v739
      %v785 = vunpack.c.h.b16 %v739
      %v786 = vunpack.c.l.b16 %v740
      %v787 = vunpack.c.h.b16 %v740
      %v788 = vunpack.c.l.b16 %v741
      %v789 = vunpack.c.h.b16 %v741
      %v790 = vpack.c.b16 %v758, %v758
      %v791 = vpack.c.b16 %v759, %v759
      %v792 = vpack.c.b16 %v760, %v760
      %v793 = vpack.c.b16 %v761, %v761
      %v794 = vpack.c.b16 %v762, %v762
      %v795 = vpack.c.b16 %v763, %v763
      %v796 = vpack.c.b16 %v764, %v764
      %v797 = vpack.c.b16 %v765, %v765
      %v798 = vpack.c.b16 %v766, %v766
      %v799 = vpack.c.b16 %v767, %v767
      %v800 = vpack.c.b16 %v768, %v768
      %v801 = vpack.c.b16 %v769, %v769
      %v802 = vpack.c.b16 %v770, %v770
      %v803 = vpack.c.b16 %v771, %v771
      %v804 = vpack.c.b16 %v772, %v772
      %v805 = vpack.c.b16 %v773, %v773
      %v806 = vpack.c.b16 %v774, %v774
      %v807 = vpack.c.b16 %v775, %v775
      %v808 = vpack.c.b16 %v776, %v776
      %v809 = vpack.c.b16 %v777, %v777
      %v810 = vpack.c.b16 %v778, %v778
      %v811 = vpack.c.b16 %v779, %v779
      %v812 = vpack.c.b16 %v780, %v780
      %v813 = vpack.c.b16 %v781, %v781
      %v814 = vpack.c.b16 %v782, %v782
      %v815 = vpack.c.b16 %v783, %v783
      %v816 = vpack.c.b16 %v784, %v784
      %v817 = vpack.c.b16 %v785, %v785
      %v818 = vpack.c.b16 %v786, %v786
      %v819 = vpack.c.b16 %v787, %v787
      %v820 = vpack.c.b16 %v788, %v788
      %v821 = vpack.c.b16 %v789, %v789
      %vm854 = vcmask 60416
      %855 = vst.msk [vmem:[%s262] sm:$0xf] %vm854, %v790
      %856 = vst.msk [vmem:[%s262 + $0x4] sm:$0xf] %vm854, %v791
      %857 = vst.msk [vmem:[%s262 + $0x8] sm:$0xf] %vm854, %v792
      %858 = vst.msk [vmem:[%s262 + $0xc] sm:$0xf] %vm854, %v793
      %859 = vst.msk [vmem:[%s262 + $0x10] sm:$0xf] %vm854, %v794
      %860 = vst.msk [vmem:[%s262 + $0x14] sm:$0xf] %vm854, %v795
      %861 = vst.msk [vmem:[%s262 + $0x18] sm:$0xf] %vm854, %v796
      %862 = vst.msk [vmem:[%s262 + $0x1c] sm:$0xf] %vm854, %v797
      %863 = vst.msk [vmem:[%s262 + $0x20] sm:$0xf] %vm854, %v798
      %864 = vst.msk [vmem:[%s262 + $0x24] sm:$0xf] %vm854, %v799
      %865 = vst.msk [vmem:[%s262 + $0x28] sm:$0xf] %vm854, %v800
      %866 = vst.msk [vmem:[%s262 + $0x2c] sm:$0xf] %vm854, %v801
      %867 = vst.msk [vmem:[%s262 + $0x30] sm:$0xf] %vm854, %v802
      %868 = vst.msk [vmem:[%s262 + $0x34] sm:$0xf] %vm854, %v803
      %869 = vst.msk [vmem:[%s262 + $0x38] sm:$0xf] %vm854, %v804
      %870 = vst.msk [vmem:[%s262 + $0x3c] sm:$0xf] %vm854, %v805
      %871 = vst.msk [vmem:[%s262 + $0x40] sm:$0xf] %vm854, %v806
      %872 = vst.msk [vmem:[%s262 + $0x44] sm:$0xf] %vm854, %v807
      %873 = vst.msk [vmem:[%s262 + $0x48] sm:$0xf] %vm854, %v808
      %874 = vst.msk [vmem:[%s262 + $0x4c] sm:$0xf] %vm854, %v809
      %875 = vst.msk [vmem:[%s262 + $0x50] sm:$0xf] %vm854, %v810
      %876 = vst.msk [vmem:[%s262 + $0x54] sm:$0xf] %vm854, %v811
      %877 = vst.msk [vmem:[%s262 + $0x58] sm:$0xf] %vm854, %v812
      %878 = vst.msk [vmem:[%s262 + $0x5c] sm:$0xf] %vm854, %v813
      %879 = vst.msk [vmem:[%s262 + $0x60] sm:$0xf] %vm854, %v814
      %880 = vst.msk [vmem:[%s262 + $0x64] sm:$0xf] %vm854, %v815
      %881 = vst.msk [vmem:[%s262 + $0x68] sm:$0xf] %vm854, %v816
      %882 = vst.msk [vmem:[%s262 + $0x6c] sm:$0xf] %vm854, %v817
      %883 = vst.msk [vmem:[%s262 + $0x70] sm:$0xf] %vm854, %v818
      %884 = vst.msk [vmem:[%s262 + $0x74] sm:$0xf] %vm854, %v819
      %885 = vst.msk [vmem:[%s262 + $0x78] sm:$0xf] %vm854, %v820
      %886 = vst.msk [vmem:[%s262 + $0x7c] sm:$0xf] %vm854, %v821
      %s887 = smul.u32 32, %s21
      %p888 = scmp.lt.s32.totalorder %s20, 1
      %s889 = scalar_select %p888, %s20, 1
      %p890 = scmp.lt.s32.totalorder %s887, 31
      %s891 = scalar_select %p890, %s887, 31
      %s892 = smul.addr %s889, 32
      %s893 = sadd.s32 %s891, %s892
      %s894 = smul.addr %s893, 4
      %s895 = scalar_lea.vmem %s5, %s894
      // Predicated region
      $region41: #{tpu_custom_call.1} parent=39 // pred_check
        %p896 = pneg %p160
      $region42: #{tpu_custom_call.1} parent=39 // pred_check_branch
        %898 = sbr.rel (%p896) target = $region44
      $region43: #{tpu_custom_call.1} parent=39 // pred_region
        %s899 = smul.u32 32, %s21
      $region44: #{tpu_custom_call.1} parent=39 // pred_fallthru
        _
    $region40: #{tpu_custom_call.1} parent=5 // pred_fallthru
      _
    %p900 = scmp.le.s32.totalorder 2, %s11
    // Predicated region
    $region45: #{tpu_custom_call.1} parent=5 // pred_check
      %p901 = pneg %p900
    $region46: #{tpu_custom_call.1} parent=5 // pred_check_branch
      %903 = sbr.rel (%p901) target = $region48
    $region47: #{tpu_custom_call.1} parent=5 // pred_region
      %s904 = ssub.s32 %s11, 2
      // Predicated region
      $region49: #{tpu_custom_call.1} parent=47 // pred_check
        %p905 = pneg %p166
      $region50: #{tpu_custom_call.1} parent=47 // pred_check_branch
        %907 = sbr.rel (%p905) target = $region52
      $region51: #{tpu_custom_call.1} parent=47 // pred_region
        %s908 = smul.u32 32, %s23
        %p909 = scmp.lt.s32.totalorder %s22, 1
        %s910 = scalar_select %p909, %s22, 1
        %p911 = scmp.lt.s32.totalorder %s908, 31
        %s912 = scalar_select %p911, %s908, 31
        %s913 = smul.addr %s910, 32
        %s914 = sadd.s32 %s912, %s913
        %s915 = smul.addr %s914, 4
        %s916 = scalar_lea.vmem %s5, %s915
      $region52: #{tpu_custom_call.1} parent=47 // pred_fallthru
        _
    $region48: #{tpu_custom_call.1} parent=5 // pred_fallthru
      _
  $region6: #{tpu_custom_call.1} parent=0 // loop_footer
    %s15 = sadd.s32 1, %s11
  $region7: #{tpu_custom_call.1} parent=0 // loop_footer_branch
    %10 = sbr.rel target = $region3
  $region8: #{tpu_custom_call.1} parent=0 // loop_exit
    _

</llo_original>
